<compile_context>
chip_gen: v6e
topology: v6e:2x2x1
jax: 0.10.0
libtpu: 0.0.40
codegen_flags: <defaults>
</compile_context>

<pallas_src>
import functools

import jax
import jax.numpy as jnp
from jax import lax
from jax.experimental import pallas as pl
from jax.experimental.pallas import tpu as pltpu


def _round_up(n: int, m: int) -> int:
    return ((n + m - 1) // m) * m


# ----------------------------------------------------------------------------
# Kernel: one batch-tile of one-hot rows.
#   idx_ref : (TB, 1)      int32   indices
#   o_ref   : (TB, N_pad)  float   one-hot rows (lane-dense, N_pad % 128 == 0)
# ----------------------------------------------------------------------------
def _onehot_kernel(idx_ref, o_ref, *, num_embeddings: int):
    # torch: x.clamp_(max=num_embeddings - 1)  (upper clamp only).
    idx = jnp.minimum(idx_ref[...], num_embeddings - 1)            # (TB, 1)
    lanes = lax.broadcasted_iota(jnp.int32, o_ref.shape, 1)        # (TB, N_pad)
    # Columns >= num_embeddings can never match a clamped index, so the pad
    # lanes are guaranteed zero.
    o_ref[...] = (lanes == idx).astype(o_ref.dtype)


# ----------------------------------------------------------------------------
# Wrapper: arbitrary-shaped integer input -> (..., num_embeddings) float32.
# ----------------------------------------------------------------------------
@functools.partial(
    jax.jit, static_argnames=("num_embeddings", "block_b", "out_dtype")
)
def onehot_encode(x, *, num_embeddings: int, block_b: int = 512,
                  out_dtype=jnp.float32):
    orig_shape = x.shape
    idx = x.reshape(-1).astype(jnp.int32)
    B = idx.shape[0]

    # Lane-dense feature width (multiple of 128) and sublane-aligned batch tile.
    n_pad = _round_up(max(num_embeddings, 128), 128)
    tb = min(block_b, _round_up(B, 8))          # always a multiple of 8
    b_pad = _round_up(B, tb)
    if b_pad != B:
        idx = jnp.pad(idx, (0, b_pad - B))      # padded rows sliced off below
    idx2d = idx.reshape(b_pad, 1)

    grid = (pl.cdiv(b_pad, tb),)
    out = pl.pallas_call(
        functools.partial(_onehot_kernel, num_embeddings=num_embeddings),
        out_shape=jax.ShapeDtypeStruct((b_pad, n_pad), out_dtype),
        grid=grid,
        in_specs=[pl.BlockSpec((tb, 1), lambda i: (i, 0))],
        out_specs=pl.BlockSpec((tb, n_pad), lambda i: (i, 0)),
        compiler_params=pltpu.CompilerParams(
            dimension_semantics=("parallel",)),   # megacore sharding on v7x
    )(idx2d)

    # Slice back to the exact reference shape.  (A downstream consumer that can
    # accept the lane-padded slab should use `out[:B]` directly instead.)
    out = out[:B, :num_embeddings]
    return out.reshape(*orig_shape, num_embeddings)


# TODO(synk): negative indices would raise inside torch.nn.Embedding; here they
# simply produce an all-zero row (no clean Pallas equivalent of that error).

if __name__ == "__main__":
    key = jax.random.PRNGKey(0)
    k1, k2 = jax.random.split(key)

    num_embeddings = 16

    # Test 1: flat batch, includes out-of-range values to exercise the clamp.
    B = 8
    x1 = jax.random.randint(k1, (B,), 0, num_embeddings + 4, dtype=jnp.int32)
    y1 = jax.block_until_ready(onehot_encode(x1, num_embeddings=num_embeddings))
    ref1 = jax.nn.one_hot(jnp.minimum(x1, num_embeddings - 1),
                          num_embeddings, dtype=jnp.float32)
    assert y1.shape == (B, num_embeddings), y1.shape
    assert y1.dtype == jnp.float32
    assert bool(jnp.all(y1 == ref1))

    # Test 2: 2-D index tensor + multi-block batch grid (block_b=8 -> grid=(3,)).
    x2 = jax.random.randint(k2, (3, 8), 0, num_embeddings, dtype=jnp.int32)
    y2 = jax.block_until_ready(
        onehot_encode(x2, num_embeddings=num_embeddings, block_b=8))
    ref2 = jax.nn.one_hot(x2, num_embeddings, dtype=jnp.float32)
    assert y2.shape == (3, 8, num_embeddings), y2.shape
    assert bool(jnp.all(y2 == ref2))

    print("KERNEL_OK")
</pallas_src>

<mosaic_0001>
module attributes {stable_mosaic.version = 11 : i64} {
  func.func @_onehot_kernel(%arg0: i32, %arg1: memref<8x1xi32, #tpu.memory_space<vmem>>, %arg2: memref<8x128xf32, #tpu.memory_space<vmem>>) attributes {dimension_semantics = [#tpu.dimension_semantics<parallel>], iteration_bounds = array<i64: 1>, scalar_prefetch = 0 : i64, scratch_operands = 0 : i64, tpu.core_type = #tpu.core_type<tc>, window_params = [{transform_indices = @transform_0, window_bounds = array<i64: 8, 1>}, {transform_indices = @transform_1, window_bounds = array<i64: 8, 128>}]} {
    %c0 = arith.constant 0 : index
    %c0_0 = arith.constant 0 : index
    %0 = vector.load %arg1[%c0, %c0_0] : memref<8x1xi32, #tpu.memory_space<vmem>>, vector<8x1xi32>
    %c15_i32 = arith.constant 15 : i32
    %1 = vector.broadcast %c15_i32 : i32 to vector<8x1xi32>
    %2 = arith.minsi %0, %1 : vector<8x1xi32>
    %3 = tpu.iota {dimensions = array<i32: 1>} : vector<8x128xi32>
    %4 = vector.broadcast %2 : vector<8x1xi32> to vector<8x128xi32>
    %5 = arith.cmpi eq, %3, %4 : vector<8x128xi32>
    %6 = arith.extui %5 : vector<8x128xi1> to vector<8x128xi32>
    %7 = arith.sitofp %6 : vector<8x128xi32> to vector<8x128xf32>
    %c0_1 = arith.constant 0 : index
    %c0_2 = arith.constant 0 : index
    %8 = vector.load %arg2[%c0_1, %c0_2] : memref<8x128xf32, #tpu.memory_space<vmem>>, vector<8x128xf32>
    tpu.vector_store %arg2[%c0_1, %c0_2], %7 {strides = array<i32>} : memref<8x128xf32, #tpu.memory_space<vmem>>, vector<8x128xf32>,
    return
  }
  func.func @transform_0(%arg0: i32) -> (i32, i32) {
    %c0_i32 = arith.constant 0 : i32
    %c0_i32_0 = arith.constant 0 : i32
    return %arg0, %c0_i32 : i32, i32
  }
  func.func @transform_1(%arg0: i32) -> (i32, i32) {
    %c0_i32 = arith.constant 0 : i32
    %c0_i32_0 = arith.constant 0 : i32
    return %arg0, %c0_i32 : i32, i32
  }
}

</mosaic_0001>

<llo_original>
// kernel: onehot_encode.1
$region0: #{onehot_encode.1}
  #allocation0 [shape = 'u32[]', space=smem, size = 0x4, offset = 0x4, fixed_abs, tag = 'smem constant byte address 0x4 - core index']
  #allocation1 [shape = 'u32[144,128]{1,0:T(1,128)}', space=vmem, size = 0x12000, scoped, tag = 'internal scratch']
  %s0 = inlined_call_operand.vmem [shape: s32[8,1], index: 0, kind: input, shape index: {}]
  %s1 = inlined_call_operand.hbm [shape: f32[8,128], index: 1, kind: output, shape index: {}]
  %s2 = sld [smem:[#allocation0]]
  $region14: #{onehot_encode.1} parent=0
    _
  %s4 = ssub.s32 1, %s2
  %s5 = scalar_select 0, %s4, %s2
  $region1: #{onehot_encode.1} parent=0
    #allocation2 [shape = 'u8[4096]{0}', space=vmem, size = 0x1000, scoped, tag = 'output window, operand 0, single buffered']
    #allocation3 [shape = 's32[1]{0}', space=sflag, size = 0x4, scoped, tag = 'scoped memory for onehot_encode.1']
    %6 = vsyncpa [#allocation3], 0
    // Predicated region
    $region2: #{onehot_encode.1} parent=1 // pred_check
      _
    $region3: #{onehot_encode.1} parent=1 // pred_check_branch
      %8 = sbr.rel (0) target = $region5
    $region4: #{onehot_encode.1} parent=1 // pred_region
      _
    $region5: #{onehot_encode.1} parent=1 // pred_fallthru
      _
    %v9 = vld [vmem:[%s0] sm:$0xff]
    %vm10 = vcmp.lt.s32.totalorder %v9, 15
    %v11 = vsel %vm10, %v9, 15
    %v12 = vlaneseq
    %v13 = vand.u32 %v12, 127
    %14 = vset.pattern.permute.xlu0 0
    %15 = vperm.xlu0 %14, %v11
    %v16 = vpop.permute.xlu0 %15
    %vm17 = vcmp.eq.s32.totalorder %v13, %v16
    %v18 = vsel %vm17, 1, 0
    %v19 = vcvt.s32.f32 %v18
    %20 = vst [vmem:[#allocation2] sm:$0xff] %v19
    // Predicated region
    $region6: #{onehot_encode.1} parent=1 // pred_check
      _
    $region7: #{onehot_encode.1} parent=1 // pred_check_branch
      %22 = sbr.rel (0) target = $region9
    $region8: #{onehot_encode.1} parent=1 // pred_region
      %s24 = ssub.s32 128, 128
      %25 = vsyncadd [#allocation3], %s24
      %s27 = sshll.u32 [#allocation2], 4
      %s28 = int_to_ptr.vmem [resolvable:$true] %s27
      %30 = dma.vmem_to_hbm [thread:$0]  %s28, 128, %s1, [#allocation3]
    $region9: #{onehot_encode.1} parent=1 // pred_fallthru
      _
    // Predicated region
    $region10: #{onehot_encode.1} parent=1 // pred_check
      _
    $region11: #{onehot_encode.1} parent=1 // pred_check_branch
      %32 = sbr.rel (0) target = $region13
    $region12: #{onehot_encode.1} parent=1 // pred_region
      %33 = dma.done [#allocation3], 128
    $region13: #{onehot_encode.1} parent=1 // pred_fallthru
      _
    %34 = vsyncpa [#allocation3], 1

</llo_original>
